<compile_context>
chip_gen: v7x
topology: tpu7x:2x2x1
jax: 0.10.0
libtpu: 0.0.40
codegen_flags: <defaults>
</compile_context>

<pallas_src>
import jax
import jax.numpy as jnp
from jax.experimental import pallas as pl
from jax.experimental.pallas import tpu as pltpu  # noqa: F401  (kept for TPU-specific tuning hooks)

INPUT_SIZE = 1
HIDDEN_SIZE = 16
NUM_LAYERS = 1
OUTPUT_SIZE = 1


def rnn_linear_kernel(data_ref, p_ref, out_ref):
    """Single-block kernel (no grid).

    data: (B + T*B, H)  rows 0..B-1  = h0
                        row  B + t*B + b = x[b, t] broadcast across the H lanes
    p:    (H + 4, H)    rows 0..H-1 = W_hh^T, row H = W_ih^T (input_size==1),
                        row H+1 = b_ih + b_hh, row H+2 = w_lin row,
                        row H+3 = b_lin broadcast across lanes
    out:  (B, H + T*B)  cols 0..H-1 = h_n,  cols H.. = y_t (time-major; B==1)
    """
    H = p_ref.shape[1]
    B = out_ref.shape[0]
    TB = out_ref.shape[1] - H          # == T*B (== T since B == 1)
    T = TB // B

    # Parameter slab: static-offset loads from one VMEM tile.
    whh_t = p_ref[0:H, :]              # (H, H)  = W_hh^T
    wih_row = p_ref[H:H + 1, :]        # (1, H)  = W_ih^T row
    bias = p_ref[H + 1:H + 2, :]       # (1, H)  = b_ih + b_hh
    wlin_row = p_ref[H + 2:H + 3, :]   # (1, H)  = Linear weight row
    blin = p_ref[H + 3:H + 4, 0:1]     # (1, 1)  = Linear bias

    data = data_ref[...]
    h = data[0:B, :]                   # (B, H) initial hidden state

    # Hoisted input affine: one vectorized VPU op covering every timestep.
    pre_all = data[B:, :] * wih_row + bias          # (T*B, H), time-major rows

    # Fully unrolled recurrence (T static & small): static indices everywhere,
    # full scheduler visibility across the serial h_t -> h_{t+1} chain.
    hs = []
    for t in range(T):
        pre_t = pre_all[t * B:(t + 1) * B]          # (B, H), static slice
        h = jnp.tanh(pre_t + jnp.dot(h, whh_t, preferred_element_type=jnp.float32))
        hs.append(h)

    # Output projection entirely off the serial chain: one MXU contraction over
    # H gives the whole y row lane-dense, no per-step reduce / masked store.
    h_all = jnp.concatenate(hs, axis=0)             # (T*B, H), static concat
    y_row = jax.lax.dot_general(
        wlin_row, h_all,
        dimension_numbers=(((1,), (1,)), ((), ())),
        preferred_element_type=jnp.float32) + blin  # (1, T*B)

    # Single merged, lane-dense store: [h_n | y_0 .. y_{T-1}].
    out_ref[...] = jnp.concatenate([h, y_row], axis=1)


def pack_params(params):
    """Build the constant (H+4, H) parameter slab ONCE (outside the hot path)."""
    H = HIDDEN_SIZE
    whh_t = params["w_hh"].T.astype(jnp.float32)                       # (H, H)
    wih_row = params["w_ih"].reshape(1, H).astype(jnp.float32)         # (1, H)
    bias = (params["b_ih"] + params["b_hh"]).reshape(1, H).astype(jnp.float32)
    wlin_row = params["w_lin"].reshape(1, H).astype(jnp.float32)       # (1, H)
    blin_row = jnp.broadcast_to(params["b_lin"].reshape(1, 1), (1, H)).astype(jnp.float32)
    return jnp.concatenate([whh_t, wih_row, bias, wlin_row, blin_row], axis=0)


def net_forward(x, hidden_prev, params, packed_params=None):
    """x: (B, T, 1) float32 (batch_first), hidden_prev: (B, num_layers, H)."""
    B, T, In = x.shape
    H = HIDDEN_SIZE
    assert In == INPUT_SIZE == 1, "kernel exploits input_size == 1"
    assert B == 1, "module hardcodes batch_size == 1 (packed single-DMA layout)"

    pslab = pack_params(params) if packed_params is None else packed_params

    # Data slab: [h0 ; x time-major, broadcast across the H lanes].
    h0 = hidden_prev[:, 0, :].astype(jnp.float32)                       # (B, H)
    x_tb = jnp.transpose(x, (1, 0, 2)).reshape(T * B, 1).astype(jnp.float32)
    x_bcast = jnp.broadcast_to(x_tb, (T * B, H))
    data = jnp.concatenate([h0, x_bcast], axis=0)                       # (B+T*B, H)

    # No grid, no BlockSpecs: one block, whole arrays resident in VMEM,
    # 2 input DMAs + 1 output DMA total.
    out = pl.pallas_call(
        rnn_linear_kernel,
        out_shape=jax.ShapeDtypeStruct((B, H + T * B), jnp.float32),
    )(data, pslab)

    hn = out[:, :H][None]                                   # (num_layers, B, H)
    y = out[:, H:].reshape(B * T, OUTPUT_SIZE)[None]        # (1, B*T, 1)
    return y, hn


def ref_forward(x, hidden_prev, params):
    """Pure-JAX reference mirroring PyTorch nn.RNN(tanh) + Linear."""
    B, T, _ = x.shape
    h = hidden_prev[:, 0, :]
    outs = []
    for t in range(T):
        h = jnp.tanh(x[:, t, :] @ params["w_ih"].T + params["b_ih"]
                     + h @ params["w_hh"].T + params["b_hh"])
        outs.append(h)
    out = jnp.stack(outs, axis=1)                      # (B, T, H)
    flat = out.reshape(-1, HIDDEN_SIZE)                # (B*T, H)
    y = flat @ params["w_lin"].T + params["b_lin"]     # (B*T, 1)
    return y[None], h[None]


if __name__ == "__main__":
    key = jax.random.PRNGKey(0)
    kx, k1, k2, k3, k4, k5, k6 = jax.random.split(key, 7)

    B, T = 1, 8                                        # module hardcodes batch_size = 1
    x = jax.random.normal(kx, (B, T, INPUT_SIZE), dtype=jnp.float32)
    hidden_prev = jnp.zeros((B, NUM_LAYERS, HIDDEN_SIZE), dtype=jnp.float32)

    # RNN params: normal(0, 0.001) as in the module; Linear: U(-1/sqrt(H), 1/sqrt(H)).
    bound = 1.0 / (HIDDEN_SIZE ** 0.5)
    params = {
        "w_ih": 0.001 * jax.random.normal(k1, (HIDDEN_SIZE, INPUT_SIZE), jnp.float32),
        "w_hh": 0.001 * jax.random.normal(k2, (HIDDEN_SIZE, HIDDEN_SIZE), jnp.float32),
        "b_ih": 0.001 * jax.random.normal(k3, (HIDDEN_SIZE,), jnp.float32),
        "b_hh": 0.001 * jax.random.normal(k4, (HIDDEN_SIZE,), jnp.float32),
        "w_lin": jax.random.uniform(k5, (OUTPUT_SIZE, HIDDEN_SIZE), jnp.float32, -bound, bound),
        "b_lin": jax.random.uniform(k6, (OUTPUT_SIZE,), jnp.float32, -bound, bound),
    }

    packed = pack_params(params)                       # built once, reused per call
    y, hn = net_forward(x, hidden_prev, params, packed_params=packed)
    jax.block_until_ready((y, hn))

    y_ref, hn_ref = ref_forward(x, hidden_prev, params)
    assert y.shape == (1, B * T, OUTPUT_SIZE) and hn.shape == (NUM_LAYERS, B, HIDDEN_SIZE)
    assert jnp.allclose(y, y_ref, atol=1e-5, rtol=1e-5)
    assert jnp.allclose(hn, hn_ref, atol=1e-5, rtol=1e-5)

    print("KERNEL_OK")
</pallas_src>

<mosaic_0001>
module attributes {stable_mosaic.version = 11 : i64} {
  func.func @rnn_linear_kernel(%arg0: memref<9x16xf32, #tpu.memory_space<vmem>>, %arg1: memref<20x16xf32, #tpu.memory_space<vmem>>, %arg2: memref<1x24xf32, #tpu.memory_space<vmem>>) attributes {dimension_semantics = [], scalar_prefetch = 0 : i64, scratch_operands = 0 : i64, tpu.core_type = #tpu.core_type<tc>} {
    %c0 = arith.constant 0 : index
    %c0_0 = arith.constant 0 : index
    %0 = vector.load %arg1[%c0, %c0_0] : memref<20x16xf32, #tpu.memory_space<vmem>>, vector<16x16xf32>
    %c16 = arith.constant 16 : index
    %c0_1 = arith.constant 0 : index
    %1 = vector.load %arg1[%c16, %c0_1] : memref<20x16xf32, #tpu.memory_space<vmem>>, vector<1x16xf32>
    %c17 = arith.constant 17 : index
    %c0_2 = arith.constant 0 : index
    %2 = vector.load %arg1[%c17, %c0_2] : memref<20x16xf32, #tpu.memory_space<vmem>>, vector<1x16xf32>
    %c18 = arith.constant 18 : index
    %c0_3 = arith.constant 0 : index
    %3 = vector.load %arg1[%c18, %c0_3] : memref<20x16xf32, #tpu.memory_space<vmem>>, vector<1x16xf32>
    %c19 = arith.constant 19 : index
    %c0_4 = arith.constant 0 : index
    %4 = vector.load %arg1[%c19, %c0_4] : memref<20x16xf32, #tpu.memory_space<vmem>>, vector<1x1xf32>
    %c0_5 = arith.constant 0 : index
    %c0_6 = arith.constant 0 : index
    %5 = vector.load %arg0[%c0_5, %c0_6] : memref<9x16xf32, #tpu.memory_space<vmem>>, vector<9x16xf32>
    %6 = vector.extract_strided_slice %5 {offsets = [0, 0], sizes = [1, 16], strides = [1, 1]} : vector<9x16xf32> to vector<1x16xf32>
    %7 = vector.extract_strided_slice %5 {offsets = [1, 0], sizes = [8, 16], strides = [1, 1]} : vector<9x16xf32> to vector<8x16xf32>
    %8 = vector.broadcast %1 : vector<1x16xf32> to vector<8x16xf32>
    %9 = arith.mulf %7, %8 : vector<8x16xf32>
    %10 = vector.broadcast %2 : vector<1x16xf32> to vector<8x16xf32>
    %11 = arith.addf %9, %10 : vector<8x16xf32>
    %12 = vector.extract_strided_slice %11 {offsets = [0, 0], sizes = [1, 16], strides = [1, 1]} : vector<8x16xf32> to vector<1x16xf32>
    %cst = arith.constant dense<0.000000e+00> : vector<1x16xf32>
    %13 = tpu.matmul %6, %0, %cst {dimension_numbers = #tpu.dot_dimension_numbers<[1], [0], [0], [1], [0, 0, 1, 1], [], []>} : vector<1x16xf32>, vector<16x16xf32>, vector<1x16xf32> -> vector<1x16xf32>
    %14 = arith.addf %12, %13 : vector<1x16xf32>
    %15 = math.tanh %14 : vector<1x16xf32>
    %16 = vector.extract_strided_slice %11 {offsets = [1, 0], sizes = [1, 16], strides = [1, 1]} : vector<8x16xf32> to vector<1x16xf32>
    %cst_7 = arith.constant dense<0.000000e+00> : vector<1x16xf32>
    %17 = tpu.matmul %15, %0, %cst_7 {dimension_numbers = #tpu.dot_dimension_numbers<[1], [0], [0], [1], [0, 0, 1, 1], [], []>} : vector<1x16xf32>, vector<16x16xf32>, vector<1x16xf32> -> vector<1x16xf32>
    %18 = arith.addf %16, %17 : vector<1x16xf32>
    %19 = math.tanh %18 : vector<1x16xf32>
    %20 = vector.extract_strided_slice %11 {offsets = [2, 0], sizes = [1, 16], strides = [1, 1]} : vector<8x16xf32> to vector<1x16xf32>
    %cst_8 = arith.constant dense<0.000000e+00> : vector<1x16xf32>
    %21 = tpu.matmul %19, %0, %cst_8 {dimension_numbers = #tpu.dot_dimension_numbers<[1], [0], [0], [1], [0, 0, 1, 1], [], []>} : vector<1x16xf32>, vector<16x16xf32>, vector<1x16xf32> -> vector<1x16xf32>
    %22 = arith.addf %20, %21 : vector<1x16xf32>
    %23 = math.tanh %22 : vector<1x16xf32>
    %24 = vector.extract_strided_slice %11 {offsets = [3, 0], sizes = [1, 16], strides = [1, 1]} : vector<8x16xf32> to vector<1x16xf32>
    %cst_9 = arith.constant dense<0.000000e+00> : vector<1x16xf32>
    %25 = tpu.matmul %23, %0, %cst_9 {dimension_numbers = #tpu.dot_dimension_numbers<[1], [0], [0], [1], [0, 0, 1, 1], [], []>} : vector<1x16xf32>, vector<16x16xf32>, vector<1x16xf32> -> vector<1x16xf32>
    %26 = arith.addf %24, %25 : vector<1x16xf32>
    %27 = math.tanh %26 : vector<1x16xf32>
    %28 = vector.extract_strided_slice %11 {offsets = [4, 0], sizes = [1, 16], strides = [1, 1]} : vector<8x16xf32> to vector<1x16xf32>
    %cst_10 = arith.constant dense<0.000000e+00> : vector<1x16xf32>
    %29 = tpu.matmul %27, %0, %cst_10 {dimension_numbers = #tpu.dot_dimension_numbers<[1], [0], [0], [1], [0, 0, 1, 1], [], []>} : vector<1x16xf32>, vector<16x16xf32>, vector<1x16xf32> -> vector<1x16xf32>
    %30 = arith.addf %28, %29 : vector<1x16xf32>
    %31 = math.tanh %30 : vector<1x16xf32>
    %32 = vector.extract_strided_slice %11 {offsets = [5, 0], sizes = [1, 16], strides = [1, 1]} : vector<8x16xf32> to vector<1x16xf32>
    %cst_11 = arith.constant dense<0.000000e+00> : vector<1x16xf32>
    %33 = tpu.matmul %31, %0, %cst_11 {dimension_numbers = #tpu.dot_dimension_numbers<[1], [0], [0], [1], [0, 0, 1, 1], [], []>} : vector<1x16xf32>, vector<16x16xf32>, vector<1x16xf32> -> vector<1x16xf32>
    %34 = arith.addf %32, %33 : vector<1x16xf32>
    %35 = math.tanh %34 : vector<1x16xf32>
    %36 = vector.extract_strided_slice %11 {offsets = [6, 0], sizes = [1, 16], strides = [1, 1]} : vector<8x16xf32> to vector<1x16xf32>
    %cst_12 = arith.constant dense<0.000000e+00> : vector<1x16xf32>
    %37 = tpu.matmul %35, %0, %cst_12 {dimension_numbers = #tpu.dot_dimension_numbers<[1], [0], [0], [1], [0, 0, 1, 1], [], []>} : vector<1x16xf32>, vector<16x16xf32>, vector<1x16xf32> -> vector<1x16xf32>
    %38 = arith.addf %36, %37 : vector<1x16xf32>
    %39 = math.tanh %38 : vector<1x16xf32>
    %40 = vector.extract_strided_slice %11 {offsets = [7, 0], sizes = [1, 16], strides = [1, 1]} : vector<8x16xf32> to vector<1x16xf32>
    %cst_13 = arith.constant dense<0.000000e+00> : vector<1x16xf32>
    %41 = tpu.matmul %39, %0, %cst_13 {dimension_numbers = #tpu.dot_dimension_numbers<[1], [0], [0], [1], [0, 0, 1, 1], [], []>} : vector<1x16xf32>, vector<16x16xf32>, vector<1x16xf32> -> vector<1x16xf32>
    %42 = arith.addf %40, %41 : vector<1x16xf32>
    %43 = math.tanh %42 : vector<1x16xf32>
    %44 = tpu.concatenate %15, %19, %23, %27, %31, %35, %39, %43 in 0 : vector<1x16xf32>, vector<1x16xf32>, vector<1x16xf32>, vector<1x16xf32>, vector<1x16xf32>, vector<1x16xf32>, vector<1x16xf32>, vector<1x16xf32> -> vector<8x16xf32>
    %cst_14 = arith.constant dense<0.000000e+00> : vector<1x8xf32>
    %45 = tpu.matmul %3, %44, %cst_14 {dimension_numbers = #tpu.dot_dimension_numbers<[1], [1], [0], [0], [0, 0, 1, 0], [], []>} : vector<1x16xf32>, vector<8x16xf32>, vector<1x8xf32> -> vector<1x8xf32>
    %46 = vector.broadcast %4 : vector<1x1xf32> to vector<1x8xf32>
    %47 = arith.addf %45, %46 : vector<1x8xf32>
    %48 = tpu.concatenate %43, %47 in 1 : vector<1x16xf32>, vector<1x8xf32> -> vector<1x24xf32>
    %c0_15 = arith.constant 0 : index
    %c0_16 = arith.constant 0 : index
    %49 = vector.load %arg2[%c0_15, %c0_16] : memref<1x24xf32, #tpu.memory_space<vmem>>, vector<1x24xf32>
    tpu.vector_store %arg2[%c0_15, %c0_16], %48 {strides = array<i32>} : memref<1x24xf32, #tpu.memory_space<vmem>>, vector<1x24xf32>,
    return
  }
}

</mosaic_0001>

<llo_original>
// kernel: tpu_custom_call.1
$region0: #{tpu_custom_call.1}
  #allocation0 [shape = 'u32[]', space=smem, size = 0x4, offset = 0x4, fixed_abs, tag = 'smem constant byte address 0x4 - core index']
  #allocation1 [shape = 'u32[144,128]{1,0:T(1,128)}', space=vmem, size = 0x12000, scoped, tag = 'internal scratch']
  %s0 = inlined_call_operand.vmem [shape: f32[9,16], index: 0, kind: input, shape index: {}]
  %s1 = inlined_call_operand.vmem [shape: f32[20,16], index: 1, kind: input, shape index: {}]
  %s2 = inlined_call_operand.hbm [shape: f32[1,24], index: 2, kind: output, shape index: {}]
  %s3 = sld [smem:[#allocation0]]
  $region18: #{tpu_custom_call.1} parent=0
    _
  %s5 = ssub.s32 1, %s3
  %s6 = scalar_select 0, %s5, %s3
  $region1: #{tpu_custom_call.1} parent=0
    #allocation2 [shape = 'u8[512]{0}', space=vmem, size = 0x400, scoped, tag = 'output window, operand 0, single buffered']
    #allocation3 [shape = 's32[1]{0}', space=sflag, size = 0x4, scoped, tag = 'scoped memory for tpu_custom_call.1']
    %7 = vsyncpa [#allocation3], 0
    // Predicated region
    $region2: #{tpu_custom_call.1} parent=1 // pred_check
      _
    $region3: #{tpu_custom_call.1} parent=1 // pred_check_branch
      %9 = sbr.rel (0) target = $region5
    $region4: #{tpu_custom_call.1} parent=1 // pred_region
      _
    $region5: #{tpu_custom_call.1} parent=1 // pred_fallthru
      _
    // Predicated region
    $region6: #{tpu_custom_call.1} parent=1 // pred_check
      _
    $region7: #{tpu_custom_call.1} parent=1 // pred_check_branch
      %11 = sbr.rel (0) target = $region9
    $region8: #{tpu_custom_call.1} parent=1 // pred_region
      _
    $region9: #{tpu_custom_call.1} parent=1 // pred_fallthru
      _
    %v12 = vld [vmem:[%s1] sm:$0xff]
    %v13 = vld [vmem:[%s1 + $0x8] sm:$0xff]
    %v14 = vld [vmem:[%s1 + $0x10] sm:$0x1]
    %v15 = vld [vmem:[%s1 + $0x11] sm:$0x1]
    %v16 = vld [vmem:[%s1 + $0x12] sm:$0x1]
    %v17 = vld [vmem:[%s1 + $0x13] sm:$0x1]
    %v18 = vld [vmem:[%s0] sm:$0xff]
    %v19 = vld [vmem:[%s0 + $0x8] sm:$0x1]
    %v20 = vlaneseq
    %v21 = vshrl.u32 %v20, 7
    %v22 = vsub.s32 0, %v21
    %v23 = vrot.slane %v14, %v22
    %v24 = vmul.f32 %v18, %v23
    %v25 = vmul.f32 %v19, %v23
    %v26 = vlaneseq
    %v27 = vshrl.u32 %v26, 7
    %v28 = vsub.s32 0, %v27
    %v29 = vrot.slane %v15, %v28
    %v30 = vadd.f32 %v24, %v29
    %v31 = vadd.f32 %v25, %v29
    %vm32 = vcmask 130048
    %v34 = vsel %vm32, %v18, 0
    %36 = vmatprep.subr.mxu0 0.0
    %37 = vmatpush1.msra.mxu0 %v12
    %38 = vmatprep.subr.mxu0 0.0
    %39 = vmatpush1.msra.mxu0 %v13
    %40 = vmatprep.subr.mxu0 0.0
    %41 = vmatpush1.msra.mxu0 0.0
    %42 = vmatprep.subr.mxu0 0.0
    %43 = vmatpush1.msra.mxu0 0.0
    %44 = vmatprep.subr.mxu0 0.0
    %45 = vmatpush1.msra.mxu0 0.0
    %46 = vmatprep.subr.mxu0 0.0
    %47 = vmatpush1.msra.mxu0 0.0
    %48 = vmatprep.subr.mxu0 0.0
    %49 = vmatpush1.msra.mxu0 0.0
    %50 = vmatprep.subr.mxu0 0.0
    %51 = vmatpush1.msra.mxu0 0.0
    %52 = vmatprep.subr.mxu0 0.0
    %53 = vmatpush1.msra.mxu0 0.0
    %54 = vmatprep.subr.mxu0 0.0
    %55 = vmatpush1.msra.mxu0 0.0
    %56 = vmatprep.subr.mxu0 0.0
    %57 = vmatpush1.msra.mxu0 0.0
    %58 = vmatprep.subr.mxu0 0.0
    %59 = vmatpush1.msra.mxu0 0.0
    %60 = vmatprep.subr.mxu0 0.0
    %61 = vmatpush1.msra.mxu0 0.0
    %62 = vmatprep.subr.mxu0 0.0
    %63 = vmatpush1.msra.mxu0 0.0
    %64 = vmatprep.subr.mxu0 0.0
    %65 = vmatpush1.msra.mxu0 0.0
    %66 = vmatprep.subr.mxu0 0.0
    %67 = vmatpush1.msra.mxu0 0.0
    %68 = vmatprep.subr.mxu0 0.0
    %69 = vmatpush1.msra.mxu0 0.0
    %70 = vmatprep.subr.mxu0 0.0
    %71 = vmatpush1.msra.mxu0 0.0
    %72 = vmatprep.subr.mxu0 0.0
    %73 = vmatpush1.msra.mxu0 0.0
    %74 = vmatprep.subr.mxu0 0.0
    %75 = vmatpush1.msra.mxu0 0.0
    %76 = vmatprep.subr.mxu0 0.0
    %77 = vmatpush1.msra.mxu0 0.0
    %78 = vmatprep.subr.mxu0 0.0
    %79 = vmatpush1.msra.mxu0 0.0
    %80 = vmatprep.subr.mxu0 0.0
    %81 = vmatpush1.msra.mxu0 0.0
    %82 = vmatprep.subr.mxu0 0.0
    %83 = vmatpush1.msra.mxu0 0.0
    %84 = vmatprep.subr.mxu0 0.0
    %85 = vmatpush1.msra.mxu0 0.0
    %86 = vmatprep.subr.mxu0 0.0
    %87 = vmatpush1.msra.mxu0 0.0
    %88 = vmatprep.subr.mxu0 0.0
    %89 = vmatpush1.msra.mxu0 0.0
    %90 = vmatprep.subr.mxu0 0.0
    %91 = vmatpush1.msra.mxu0 0.0
    %92 = vmatprep.subr.mxu0 0.0
    %93 = vmatpush1.msra.mxu0 0.0
    %94 = vmatprep.subr.mxu0 0.0
    %95 = vmatpush1.msra.mxu0 0.0
    %96 = vmatprep.subr.mxu0 0.0
    %97 = vmatpush1.msra.mxu0 0.0
    %98 = vmatprep.subr.mxu0 0.0
    %99 = vmatpush1.msra.mxu0 0.0
    %100 = vmatprep.mubr.f32.mxu0 0.0
    %101 = vmatmul.mubr.f32.gmra.mrb[0].mxu0 %v34
    %v102 = vpop.f32.mrb[0].mxu0
    %v103 = vadd.f32 0.0, %v102
    %v104 = vpop.f32.mrb[0].mxu0
    %105 = vdwg.mxu0
    %v107 = vrot.slane %v103, 7
    %v109 = vadd.f32 %v30, %v107
    %v110 = vtanh.pop %v109
    %v112 = vrot.slane %v110, 1
    %v113 = vsel %vm32, %v112, 0
    %115 = vmatprep.subr.mxu0 0.0
    %116 = vmatpush1.msra.mxu0 %v12
    %117 = vmatprep.subr.mxu0 0.0
    %118 = vmatpush1.msra.mxu0 %v13
    %119 = vmatprep.subr.mxu0 0.0
    %120 = vmatpush1.msra.mxu0 0.0
    %121 = vmatprep.subr.mxu0 0.0
    %122 = vmatpush1.msra.mxu0 0.0
    %123 = vmatprep.subr.mxu0 0.0
    %124 = vmatpush1.msra.mxu0 0.0
    %125 = vmatprep.subr.mxu0 0.0
    %126 = vmatpush1.msra.mxu0 0.0
    %127 = vmatprep.subr.mxu0 0.0
    %128 = vmatpush1.msra.mxu0 0.0
    %129 = vmatprep.subr.mxu0 0.0
    %130 = vmatpush1.msra.mxu0 0.0
    %131 = vmatprep.subr.mxu0 0.0
    %132 = vmatpush1.msra.mxu0 0.0
    %133 = vmatprep.subr.mxu0 0.0
    %134 = vmatpush1.msra.mxu0 0.0
    %135 = vmatprep.subr.mxu0 0.0
    %136 = vmatpush1.msra.mxu0 0.0
    %137 = vmatprep.subr.mxu0 0.0
    %138 = vmatpush1.msra.mxu0 0.0
    %139 = vmatprep.subr.mxu0 0.0
    %140 = vmatpush1.msra.mxu0 0.0
    %141 = vmatprep.subr.mxu0 0.0
    %142 = vmatpush1.msra.mxu0 0.0
    %143 = vmatprep.subr.mxu0 0.0
    %144 = vmatpush1.msra.mxu0 0.0
    %145 = vmatprep.subr.mxu0 0.0
    %146 = vmatpush1.msra.mxu0 0.0
    %147 = vmatprep.subr.mxu0 0.0
    %148 = vmatpush1.msra.mxu0 0.0
    %149 = vmatprep.subr.mxu0 0.0
    %150 = vmatpush1.msra.mxu0 0.0
    %151 = vmatprep.subr.mxu0 0.0
    %152 = vmatpush1.msra.mxu0 0.0
    %153 = vmatprep.subr.mxu0 0.0
    %154 = vmatpush1.msra.mxu0 0.0
    %155 = vmatprep.subr.mxu0 0.0
    %156 = vmatpush1.msra.mxu0 0.0
    %157 = vmatprep.subr.mxu0 0.0
    %158 = vmatpush1.msra.mxu0 0.0
    %159 = vmatprep.subr.mxu0 0.0
    %160 = vmatpush1.msra.mxu0 0.0
    %161 = vmatprep.subr.mxu0 0.0
    %162 = vmatpush1.msra.mxu0 0.0
    %163 = vmatprep.subr.mxu0 0.0
    %164 = vmatpush1.msra.mxu0 0.0
    %165 = vmatprep.subr.mxu0 0.0
    %166 = vmatpush1.msra.mxu0 0.0
    %167 = vmatprep.subr.mxu0 0.0
    %168 = vmatpush1.msra.mxu0 0.0
    %169 = vmatprep.subr.mxu0 0.0
    %170 = vmatpush1.msra.mxu0 0.0
    %171 = vmatprep.subr.mxu0 0.0
    %172 = vmatpush1.msra.mxu0 0.0
    %173 = vmatprep.subr.mxu0 0.0
    %174 = vmatpush1.msra.mxu0 0.0
    %175 = vmatprep.subr.mxu0 0.0
    %176 = vmatpush1.msra.mxu0 0.0
    %177 = vmatprep.subr.mxu0 0.0
    %178 = vmatpush1.msra.mxu0 0.0
    %179 = vmatprep.mubr.f32.mxu0 0.0
    %180 = vmatmul.mubr.f32.gmra.mrb[0].mxu0 %v113
    %v181 = vpop.f32.mrb[0].mxu0
    %v182 = vadd.f32 0.0, %v181
    %v183 = vpop.f32.mrb[0].mxu0
    %184 = vdwg.mxu0
    %v186 = vrot.slane %v182, 6
    %v188 = vadd.f32 %v30, %v186
    %v189 = vtanh.pop %v188
    %v191 = vrot.slane %v189, 2
    %v192 = vsel %vm32, %v191, 0
    %194 = vmatprep.subr.mxu0 0.0
    %195 = vmatpush1.msra.mxu0 %v12
    %196 = vmatprep.subr.mxu0 0.0
    %197 = vmatpush1.msra.mxu0 %v13
    %198 = vmatprep.subr.mxu0 0.0
    %199 = vmatpush1.msra.mxu0 0.0
    %200 = vmatprep.subr.mxu0 0.0
    %201 = vmatpush1.msra.mxu0 0.0
    %202 = vmatprep.subr.mxu0 0.0
    %203 = vmatpush1.msra.mxu0 0.0
    %204 = vmatprep.subr.mxu0 0.0
    %205 = vmatpush1.msra.mxu0 0.0
    %206 = vmatprep.subr.mxu0 0.0
    %207 = vmatpush1.msra.mxu0 0.0
    %208 = vmatprep.subr.mxu0 0.0
    %209 = vmatpush1.msra.mxu0 0.0
    %210 = vmatprep.subr.mxu0 0.0
    %211 = vmatpush1.msra.mxu0 0.0
    %212 = vmatprep.subr.mxu0 0.0
    %213 = vmatpush1.msra.mxu0 0.0
    %214 = vmatprep.subr.mxu0 0.0
    %215 = vmatpush1.msra.mxu0 0.0
    %216 = vmatprep.subr.mxu0 0.0
    %217 = vmatpush1.msra.mxu0 0.0
    %218 = vmatprep.subr.mxu0 0.0
    %219 = vmatpush1.msra.mxu0 0.0
    %220 = vmatprep.subr.mxu0 0.0
    %221 = vmatpush1.msra.mxu0 0.0
    %222 = vmatprep.subr.mxu0 0.0
    %223 = vmatpush1.msra.mxu0 0.0
    %224 = vmatprep.subr.mxu0 0.0
    %225 = vmatpush1.msra.mxu0 0.0
    %226 = vmatprep.subr.mxu0 0.0
    %227 = vmatpush1.msra.mxu0 0.0
    %228 = vmatprep.subr.mxu0 0.0
    %229 = vmatpush1.msra.mxu0 0.0
    %230 = vmatprep.subr.mxu0 0.0
    %231 = vmatpush1.msra.mxu0 0.0
    %232 = vmatprep.subr.mxu0 0.0
    %233 = vmatpush1.msra.mxu0 0.0
    %234 = vmatprep.subr.mxu0 0.0
    %235 = vmatpush1.msra.mxu0 0.0
    %236 = vmatprep.subr.mxu0 0.0
    %237 = vmatpush1.msra.mxu0 0.0
    %238 = vmatprep.subr.mxu0 0.0
    %239 = vmatpush1.msra.mxu0 0.0
    %240 = vmatprep.subr.mxu0 0.0
    %241 = vmatpush1.msra.mxu0 0.0
    %242 = vmatprep.subr.mxu0 0.0
    %243 = vmatpush1.msra.mxu0 0.0
    %244 = vmatprep.subr.mxu0 0.0
    %245 = vmatpush1.msra.mxu0 0.0
    %246 = vmatprep.subr.mxu0 0.0
    %247 = vmatpush1.msra.mxu0 0.0
    %248 = vmatprep.subr.mxu0 0.0
    %249 = vmatpush1.msra.mxu0 0.0
    %250 = vmatprep.subr.mxu0 0.0
    %251 = vmatpush1.msra.mxu0 0.0
    %252 = vmatprep.subr.mxu0 0.0
    %253 = vmatpush1.msra.mxu0 0.0
    %254 = vmatprep.subr.mxu0 0.0
    %255 = vmatpush1.msra.mxu0 0.0
    %256 = vmatprep.subr.mxu0 0.0
    %257 = vmatpush1.msra.mxu0 0.0
    %258 = vmatprep.mubr.f32.mxu0 0.0
    %259 = vmatmul.mubr.f32.gmra.mrb[0].mxu0 %v192
    %v260 = vpop.f32.mrb[0].mxu0
    %v261 = vadd.f32 0.0, %v260
    %v262 = vpop.f32.mrb[0].mxu0
    %263 = vdwg.mxu0
    %v265 = vrot.slane %v261, 5
    %v267 = vadd.f32 %v30, %v265
    %v268 = vtanh.pop %v267
    %v270 = vrot.slane %v268, 3
    %v271 = vsel %vm32, %v270, 0
    %273 = vmatprep.subr.mxu0 0.0
    %274 = vmatpush1.msra.mxu0 %v12
    %275 = vmatprep.subr.mxu0 0.0
    %276 = vmatpush1.msra.mxu0 %v13
    %277 = vmatprep.subr.mxu0 0.0
    %278 = vmatpush1.msra.mxu0 0.0
    %279 = vmatprep.subr.mxu0 0.0
    %280 = vmatpush1.msra.mxu0 0.0
    %281 = vmatprep.subr.mxu0 0.0
    %282 = vmatpush1.msra.mxu0 0.0
    %283 = vmatprep.subr.mxu0 0.0
    %284 = vmatpush1.msra.mxu0 0.0
    %285 = vmatprep.subr.mxu0 0.0
    %286 = vmatpush1.msra.mxu0 0.0
    %287 = vmatprep.subr.mxu0 0.0
    %288 = vmatpush1.msra.mxu0 0.0
    %289 = vmatprep.subr.mxu0 0.0
    %290 = vmatpush1.msra.mxu0 0.0
    %291 = vmatprep.subr.mxu0 0.0
    %292 = vmatpush1.msra.mxu0 0.0
    %293 = vmatprep.subr.mxu0 0.0
    %294 = vmatpush1.msra.mxu0 0.0
    %295 = vmatprep.subr.mxu0 0.0
    %296 = vmatpush1.msra.mxu0 0.0
    %297 = vmatprep.subr.mxu0 0.0
    %298 = vmatpush1.msra.mxu0 0.0
    %299 = vmatprep.subr.mxu0 0.0
    %300 = vmatpush1.msra.mxu0 0.0
    %301 = vmatprep.subr.mxu0 0.0
    %302 = vmatpush1.msra.mxu0 0.0
    %303 = vmatprep.subr.mxu0 0.0
    %304 = vmatpush1.msra.mxu0 0.0
    %305 = vmatprep.subr.mxu0 0.0
    %306 = vmatpush1.msra.mxu0 0.0
    %307 = vmatprep.subr.mxu0 0.0
    %308 = vmatpush1.msra.mxu0 0.0
    %309 = vmatprep.subr.mxu0 0.0
    %310 = vmatpush1.msra.mxu0 0.0
    %311 = vmatprep.subr.mxu0 0.0
    %312 = vmatpush1.msra.mxu0 0.0
    %313 = vmatprep.subr.mxu0 0.0
    %314 = vmatpush1.msra.mxu0 0.0
    %315 = vmatprep.subr.mxu0 0.0
    %316 = vmatpush1.msra.mxu0 0.0
    %317 = vmatprep.subr.mxu0 0.0
    %318 = vmatpush1.msra.mxu0 0.0
    %319 = vmatprep.subr.mxu0 0.0
    %320 = vmatpush1.msra.mxu0 0.0
    %321 = vmatprep.subr.mxu0 0.0
    %322 = vmatpush1.msra.mxu0 0.0
    %323 = vmatprep.subr.mxu0 0.0
    %324 = vmatpush1.msra.mxu0 0.0
    %325 = vmatprep.subr.mxu0 0.0
    %326 = vmatpush1.msra.mxu0 0.0
    %327 = vmatprep.subr.mxu0 0.0
    %328 = vmatpush1.msra.mxu0 0.0
    %329 = vmatprep.subr.mxu0 0.0
    %330 = vmatpush1.msra.mxu0 0.0
    %331 = vmatprep.subr.mxu0 0.0
    %332 = vmatpush1.msra.mxu0 0.0
    %333 = vmatprep.subr.mxu0 0.0
    %334 = vmatpush1.msra.mxu0 0.0
    %335 = vmatprep.subr.mxu0 0.0
    %336 = vmatpush1.msra.mxu0 0.0
    %337 = vmatprep.mubr.f32.mxu0 0.0
    %338 = vmatmul.mubr.f32.gmra.mrb[0].mxu0 %v271
    %v339 = vpop.f32.mrb[0].mxu0
    %v340 = vadd.f32 0.0, %v339
    %v341 = vpop.f32.mrb[0].mxu0
    %342 = vdwg.mxu0
    %v344 = vrot.slane %v340, 4
    %v346 = vadd.f32 %v30, %v344
    %v347 = vtanh.pop %v346
    %v349 = vrot.slane %v347, 4
    %v350 = vsel %vm32, %v349, 0
    %352 = vmatprep.subr.mxu0 0.0
    %353 = vmatpush1.msra.mxu0 %v12
    %354 = vmatprep.subr.mxu0 0.0
    %355 = vmatpush1.msra.mxu0 %v13
    %356 = vmatprep.subr.mxu0 0.0
    %357 = vmatpush1.msra.mxu0 0.0
    %358 = vmatprep.subr.mxu0 0.0
    %359 = vmatpush1.msra.mxu0 0.0
    %360 = vmatprep.subr.mxu0 0.0
    %361 = vmatpush1.msra.mxu0 0.0
    %362 = vmatprep.subr.mxu0 0.0
    %363 = vmatpush1.msra.mxu0 0.0
    %364 = vmatprep.subr.mxu0 0.0
    %365 = vmatpush1.msra.mxu0 0.0
    %366 = vmatprep.subr.mxu0 0.0
    %367 = vmatpush1.msra.mxu0 0.0
    %368 = vmatprep.subr.mxu0 0.0
    %369 = vmatpush1.msra.mxu0 0.0
    %370 = vmatprep.subr.mxu0 0.0
    %371 = vmatpush1.msra.mxu0 0.0
    %372 = vmatprep.subr.mxu0 0.0
    %373 = vmatpush1.msra.mxu0 0.0
    %374 = vmatprep.subr.mxu0 0.0
    %375 = vmatpush1.msra.mxu0 0.0
    %376 = vmatprep.subr.mxu0 0.0
    %377 = vmatpush1.msra.mxu0 0.0
    %378 = vmatprep.subr.mxu0 0.0
    %379 = vmatpush1.msra.mxu0 0.0
    %380 = vmatprep.subr.mxu0 0.0
    %381 = vmatpush1.msra.mxu0 0.0
    %382 = vmatprep.subr.mxu0 0.0
    %383 = vmatpush1.msra.mxu0 0.0
    %384 = vmatprep.subr.mxu0 0.0
    %385 = vmatpush1.msra.mxu0 0.0
    %386 = vmatprep.subr.mxu0 0.0
    %387 = vmatpush1.msra.mxu0 0.0
    %388 = vmatprep.subr.mxu0 0.0
    %389 = vmatpush1.msra.mxu0 0.0
    %390 = vmatprep.subr.mxu0 0.0
    %391 = vmatpush1.msra.mxu0 0.0
    %392 = vmatprep.subr.mxu0 0.0
    %393 = vmatpush1.msra.mxu0 0.0
    %394 = vmatprep.subr.mxu0 0.0
    %395 = vmatpush1.msra.mxu0 0.0
    %396 = vmatprep.subr.mxu0 0.0
    %397 = vmatpush1.msra.mxu0 0.0
    %398 = vmatprep.subr.mxu0 0.0
    %399 = vmatpush1.msra.mxu0 0.0
    %400 = vmatprep.subr.mxu0 0.0
    %401 = vmatpush1.msra.mxu0 0.0
    %402 = vmatprep.subr.mxu0 0.0
    %403 = vmatpush1.msra.mxu0 0.0
    %404 = vmatprep.subr.mxu0 0.0
    %405 = vmatpush1.msra.mxu0 0.0
    %406 = vmatprep.subr.mxu0 0.0
    %407 = vmatpush1.msra.mxu0 0.0
    %408 = vmatprep.subr.mxu0 0.0
    %409 = vmatpush1.msra.mxu0 0.0
    %410 = vmatprep.subr.mxu0 0.0
    %411 = vmatpush1.msra.mxu0 0.0
    %412 = vmatprep.subr.mxu0 0.0
    %413 = vmatpush1.msra.mxu0 0.0
    %414 = vmatprep.subr.mxu0 0.0
    %415 = vmatpush1.msra.mxu0 0.0
    %416 = vmatprep.mubr.f32.mxu0 0.0
    %417 = vmatmul.mubr.f32.gmra.mrb[0].mxu0 %v350
    %v418 = vpop.f32.mrb[0].mxu0
    %v419 = vadd.f32 0.0, %v418
    %v420 = vpop.f32.mrb[0].mxu0
    %421 = vdwg.mxu0
    %v423 = vrot.slane %v419, 3
    %v425 = vadd.f32 %v30, %v423
    %v426 = vtanh.pop %v425
    %v428 = vrot.slane %v426, 5
    %v429 = vsel %vm32, %v428, 0
    %431 = vmatprep.subr.mxu0 0.0
    %432 = vmatpush1.msra.mxu0 %v12
    %433 = vmatprep.subr.mxu0 0.0
    %434 = vmatpush1.msra.mxu0 %v13
    %435 = vmatprep.subr.mxu0 0.0
    %436 = vmatpush1.msra.mxu0 0.0
    %437 = vmatprep.subr.mxu0 0.0
    %438 = vmatpush1.msra.mxu0 0.0
    %439 = vmatprep.subr.mxu0 0.0
    %440 = vmatpush1.msra.mxu0 0.0
    %441 = vmatprep.subr.mxu0 0.0
    %442 = vmatpush1.msra.mxu0 0.0
    %443 = vmatprep.subr.mxu0 0.0
    %444 = vmatpush1.msra.mxu0 0.0
    %445 = vmatprep.subr.mxu0 0.0
    %446 = vmatpush1.msra.mxu0 0.0
    %447 = vmatprep.subr.mxu0 0.0
    %448 = vmatpush1.msra.mxu0 0.0
    %449 = vmatprep.subr.mxu0 0.0
    %450 = vmatpush1.msra.mxu0 0.0
    %451 = vmatprep.subr.mxu0 0.0
    %452 = vmatpush1.msra.mxu0 0.0
    %453 = vmatprep.subr.mxu0 0.0
    %454 = vmatpush1.msra.mxu0 0.0
    %455 = vmatprep.subr.mxu0 0.0
    %456 = vmatpush1.msra.mxu0 0.0
    %457 = vmatprep.subr.mxu0 0.0
    %458 = vmatpush1.msra.mxu0 0.0
    %459 = vmatprep.subr.mxu0 0.0
    %460 = vmatpush1.msra.mxu0 0.0
    %461 = vmatprep.subr.mxu0 0.0
    %462 = vmatpush1.msra.mxu0 0.0
    %463 = vmatprep.subr.mxu0 0.0
    %464 = vmatpush1.msra.mxu0 0.0
    %465 = vmatprep.subr.mxu0 0.0
    %466 = vmatpush1.msra.mxu0 0.0
    %467 = vmatprep.subr.mxu0 0.0
    %468 = vmatpush1.msra.mxu0 0.0
    %469 = vmatprep.subr.mxu0 0.0
    %470 = vmatpush1.msra.mxu0 0.0
    %471 = vmatprep.subr.mxu0 0.0
    %472 = vmatpush1.msra.mxu0 0.0
    %473 = vmatprep.subr.mxu0 0.0
    %474 = vmatpush1.msra.mxu0 0.0
    %475 = vmatprep.subr.mxu0 0.0
    %476 = vmatpush1.msra.mxu0 0.0
    %477 = vmatprep.subr.mxu0 0.0
    %478 = vmatpush1.msra.mxu0 0.0
    %479 = vmatprep.subr.mxu0 0.0
    %480 = vmatpush1.msra.mxu0 0.0
    %481 = vmatprep.subr.mxu0 0.0
    %482 = vmatpush1.msra.mxu0 0.0
    %483 = vmatprep.subr.mxu0 0.0
    %484 = vmatpush1.msra.mxu0 0.0
    %485 = vmatprep.subr.mxu0 0.0
    %486 = vmatpush1.msra.mxu0 0.0
    %487 = vmatprep.subr.mxu0 0.0
    %488 = vmatpush1.msra.mxu0 0.0
    %489 = vmatprep.subr.mxu0 0.0
    %490 = vmatpush1.msra.mxu0 0.0
    %491 = vmatprep.subr.mxu0 0.0
    %492 = vmatpush1.msra.mxu0 0.0
    %493 = vmatprep.subr.mxu0 0.0
    %494 = vmatpush1.msra.mxu0 0.0
    %495 = vmatprep.mubr.f32.mxu0 0.0
    %496 = vmatmul.mubr.f32.gmra.mrb[0].mxu0 %v429
    %v497 = vpop.f32.mrb[0].mxu0
    %v498 = vadd.f32 0.0, %v497
    %v499 = vpop.f32.mrb[0].mxu0
    %500 = vdwg.mxu0
    %v502 = vrot.slane %v498, 2
    %v504 = vadd.f32 %v30, %v502
    %v505 = vtanh.pop %v504
    %v507 = vrot.slane %v505, 6
    %v508 = vsel %vm32, %v507, 0
    %510 = vmatprep.subr.mxu0 0.0
    %511 = vmatpush1.msra.mxu0 %v12
    %512 = vmatprep.subr.mxu0 0.0
    %513 = vmatpush1.msra.mxu0 %v13
    %514 = vmatprep.subr.mxu0 0.0
    %515 = vmatpush1.msra.mxu0 0.0
    %516 = vmatprep.subr.mxu0 0.0
    %517 = vmatpush1.msra.mxu0 0.0
    %518 = vmatprep.subr.mxu0 0.0
    %519 = vmatpush1.msra.mxu0 0.0
    %520 = vmatprep.subr.mxu0 0.0
    %521 = vmatpush1.msra.mxu0 0.0
    %522 = vmatprep.subr.mxu0 0.0
    %523 = vmatpush1.msra.mxu0 0.0
    %524 = vmatprep.subr.mxu0 0.0
    %525 = vmatpush1.msra.mxu0 0.0
    %526 = vmatprep.subr.mxu0 0.0
    %527 = vmatpush1.msra.mxu0 0.0
    %528 = vmatprep.subr.mxu0 0.0
    %529 = vmatpush1.msra.mxu0 0.0
    %530 = vmatprep.subr.mxu0 0.0
    %531 = vmatpush1.msra.mxu0 0.0
    %532 = vmatprep.subr.mxu0 0.0
    %533 = vmatpush1.msra.mxu0 0.0
    %534 = vmatprep.subr.mxu0 0.0
    %535 = vmatpush1.msra.mxu0 0.0
    %536 = vmatprep.subr.mxu0 0.0
    %537 = vmatpush1.msra.mxu0 0.0
    %538 = vmatprep.subr.mxu0 0.0
    %539 = vmatpush1.msra.mxu0 0.0
    %540 = vmatprep.subr.mxu0 0.0
    %541 = vmatpush1.msra.mxu0 0.0
    %542 = vmatprep.subr.mxu0 0.0
    %543 = vmatpush1.msra.mxu0 0.0
    %544 = vmatprep.subr.mxu0 0.0
    %545 = vmatpush1.msra.mxu0 0.0
    %546 = vmatprep.subr.mxu0 0.0
    %547 = vmatpush1.msra.mxu0 0.0
    %548 = vmatprep.subr.mxu0 0.0
    %549 = vmatpush1.msra.mxu0 0.0
    %550 = vmatprep.subr.mxu0 0.0
    %551 = vmatpush1.msra.mxu0 0.0
    %552 = vmatprep.subr.mxu0 0.0
    %553 = vmatpush1.msra.mxu0 0.0
    %554 = vmatprep.subr.mxu0 0.0
    %555 = vmatpush1.msra.mxu0 0.0
    %556 = vmatprep.subr.mxu0 0.0
    %557 = vmatpush1.msra.mxu0 0.0
    %558 = vmatprep.subr.mxu0 0.0
    %559 = vmatpush1.msra.mxu0 0.0
    %560 = vmatprep.subr.mxu0 0.0
    %561 = vmatpush1.msra.mxu0 0.0
    %562 = vmatprep.subr.mxu0 0.0
    %563 = vmatpush1.msra.mxu0 0.0
    %564 = vmatprep.subr.mxu0 0.0
    %565 = vmatpush1.msra.mxu0 0.0
    %566 = vmatprep.subr.mxu0 0.0
    %567 = vmatpush1.msra.mxu0 0.0
    %568 = vmatprep.subr.mxu0 0.0
    %569 = vmatpush1.msra.mxu0 0.0
    %570 = vmatprep.subr.mxu0 0.0
    %571 = vmatpush1.msra.mxu0 0.0
    %572 = vmatprep.subr.mxu0 0.0
    %573 = vmatpush1.msra.mxu0 0.0
    %574 = vmatprep.mubr.f32.mxu0 0.0
    %575 = vmatmul.mubr.f32.gmra.mrb[0].mxu0 %v508
    %v576 = vpop.f32.mrb[0].mxu0
    %v577 = vadd.f32 0.0, %v576
    %v578 = vpop.f32.mrb[0].mxu0
    %579 = vdwg.mxu0
    %v581 = vrot.slane %v577, 1
    %v583 = vadd.f32 %v30, %v581
    %v584 = vtanh.pop %v583
    %v586 = vrot.slane %v584, 7
    %v587 = vsel %vm32, %v586, 0
    %589 = vmatprep.subr.mxu0 0.0
    %590 = vmatpush1.msra.mxu0 %v12
    %591 = vmatprep.subr.mxu0 0.0
    %592 = vmatpush1.msra.mxu0 %v13
    %593 = vmatprep.subr.mxu0 0.0
    %594 = vmatpush1.msra.mxu0 0.0
    %595 = vmatprep.subr.mxu0 0.0
    %596 = vmatpush1.msra.mxu0 0.0
    %597 = vmatprep.subr.mxu0 0.0
    %598 = vmatpush1.msra.mxu0 0.0
    %599 = vmatprep.subr.mxu0 0.0
    %600 = vmatpush1.msra.mxu0 0.0
    %601 = vmatprep.subr.mxu0 0.0
    %602 = vmatpush1.msra.mxu0 0.0
    %603 = vmatprep.subr.mxu0 0.0
    %604 = vmatpush1.msra.mxu0 0.0
    %605 = vmatprep.subr.mxu0 0.0
    %606 = vmatpush1.msra.mxu0 0.0
    %607 = vmatprep.subr.mxu0 0.0
    %608 = vmatpush1.msra.mxu0 0.0
    %609 = vmatprep.subr.mxu0 0.0
    %610 = vmatpush1.msra.mxu0 0.0
    %611 = vmatprep.subr.mxu0 0.0
    %612 = vmatpush1.msra.mxu0 0.0
    %613 = vmatprep.subr.mxu0 0.0
    %614 = vmatpush1.msra.mxu0 0.0
    %615 = vmatprep.subr.mxu0 0.0
    %616 = vmatpush1.msra.mxu0 0.0
    %617 = vmatprep.subr.mxu0 0.0
    %618 = vmatpush1.msra.mxu0 0.0
    %619 = vmatprep.subr.mxu0 0.0
    %620 = vmatpush1.msra.mxu0 0.0
    %621 = vmatprep.subr.mxu0 0.0
    %622 = vmatpush1.msra.mxu0 0.0
    %623 = vmatprep.subr.mxu0 0.0
    %624 = vmatpush1.msra.mxu0 0.0
    %625 = vmatprep.subr.mxu0 0.0
    %626 = vmatpush1.msra.mxu0 0.0
    %627 = vmatprep.subr.mxu0 0.0
    %628 = vmatpush1.msra.mxu0 0.0
    %629 = vmatprep.subr.mxu0 0.0
    %630 = vmatpush1.msra.mxu0 0.0
    %631 = vmatprep.subr.mxu0 0.0
    %632 = vmatpush1.msra.mxu0 0.0
    %633 = vmatprep.subr.mxu0 0.0
    %634 = vmatpush1.msra.mxu0 0.0
    %635 = vmatprep.subr.mxu0 0.0
    %636 = vmatpush1.msra.mxu0 0.0
    %637 = vmatprep.subr.mxu0 0.0
    %638 = vmatpush1.msra.mxu0 0.0
    %639 = vmatprep.subr.mxu0 0.0
    %640 = vmatpush1.msra.mxu0 0.0
    %641 = vmatprep.subr.mxu0 0.0
    %642 = vmatpush1.msra.mxu0 0.0
    %643 = vmatprep.subr.mxu0 0.0
    %644 = vmatpush1.msra.mxu0 0.0
    %645 = vmatprep.subr.mxu0 0.0
    %646 = vmatpush1.msra.mxu0 0.0
    %647 = vmatprep.subr.mxu0 0.0
    %648 = vmatpush1.msra.mxu0 0.0
    %649 = vmatprep.subr.mxu0 0.0
    %650 = vmatpush1.msra.mxu0 0.0
    %651 = vmatprep.subr.mxu0 0.0
    %652 = vmatpush1.msra.mxu0 0.0
    %653 = vmatprep.mubr.f32.mxu0 0.0
    %654 = vmatmul.mubr.f32.gmra.mrb[0].mxu0 %v587
    %v655 = vpop.f32.mrb[0].mxu0
    %v656 = vadd.f32 0.0, %v655
    %v657 = vpop.f32.mrb[0].mxu0
    %658 = vdwg.mxu0
    %v659 = vadd.f32 %v31, %v656
    %v660 = vtanh.pop %v659
    %v662 = vrot.slane %v189, 1
    %v664 = vrot.slane %v268, 1
    %v666 = vrot.slane %v347, 1
    %v668 = vrot.slane %v426, 1
    %v670 = vrot.slane %v505, 1
    %v672 = vrot.slane %v584, 1
    %v675 = vrot.slane %v660, 1
    %vm677 = vcmask 1040384
    %v678 = vsel %vm677, %v112, %v662
    %vm679 = vcmask 1041408
    %v680 = vsel %vm679, %v678, %v664
    %vm681 = vcmask 1042432
    %v682 = vsel %vm681, %v680, %v666
    %vm683 = vcmask 1043456
    %v684 = vsel %vm683, %v682, %v668
    %vm685 = vcmask 1044480
    %v686 = vsel %vm685, %v684, %v670
    %vm687 = vcmask 1045504
    %v688 = vsel %vm687, %v686, %v672
    %vm689 = vcmask 1046528
    %v690 = vsel %vm689, %v688, %v675
    %692 = vset.pattern.permute.xlu0 0
    %693 = vperm.xlu0 %692, %v17
    %v694 = vpop.permute.xlu0 %693
    %v697 = vsel %vm32, %v16, 0
    %v700 = vsel %vm32, %v690, 0
    %702 = vmatprep.subr.mxu0 0.0
    %703 = vmatpush1.xpose.msra.mxu0 %v700
    %704 = vmatprep.subr.mxu0 0.0
    %705 = vmatpush1.xpose.msra.mxu0 0.0
    %706 = vmatprep.subr.mxu0 0.0
    %707 = vmatpush1.xpose.msra.mxu0 0.0
    %708 = vmatprep.subr.mxu0 0.0
    %709 = vmatpush1.xpose.msra.mxu0 0.0
    %710 = vmatprep.subr.mxu0 0.0
    %711 = vmatpush1.xpose.msra.mxu0 0.0
    %712 = vmatprep.subr.mxu0 0.0
    %713 = vmatpush1.xpose.msra.mxu0 0.0
    %714 = vmatprep.subr.mxu0 0.0
    %715 = vmatpush1.xpose.msra.mxu0 0.0
    %716 = vmatprep.subr.mxu0 0.0
    %717 = vmatpush1.xpose.msra.mxu0 0.0
    %718 = vmatprep.subr.mxu0 0.0
    %719 = vmatpush1.xpose.msra.mxu0 0.0
    %720 = vmatprep.subr.mxu0 0.0
    %721 = vmatpush1.xpose.msra.mxu0 0.0
    %722 = vmatprep.subr.mxu0 0.0
    %723 = vmatpush1.xpose.msra.mxu0 0.0
    %724 = vmatprep.subr.mxu0 0.0
    %725 = vmatpush1.xpose.msra.mxu0 0.0
    %726 = vmatprep.subr.mxu0 0.0
    %727 = vmatpush1.xpose.msra.mxu0 0.0
    %728 = vmatprep.subr.mxu0 0.0
    %729 = vmatpush1.xpose.msra.mxu0 0.0
    %730 = vmatprep.subr.mxu0 0.0
    %731 = vmatpush1.xpose.msra.mxu0 0.0
    %732 = vmatprep.subr.mxu0 0.0
    %733 = vmatpush1.xpose.msra.mxu0 0.0
    %734 = vmatprep.subr.mxu0 0.0
    %735 = vmatpush1.xpose.msra.mxu0 0.0
    %736 = vmatprep.subr.mxu0 0.0
    %737 = vmatpush1.xpose.msra.mxu0 0.0
    %738 = vmatprep.subr.mxu0 0.0
    %739 = vmatpush1.xpose.msra.mxu0 0.0
    %740 = vmatprep.subr.mxu0 0.0
    %741 = vmatpush1.xpose.msra.mxu0 0.0
    %742 = vmatprep.subr.mxu0 0.0
    %743 = vmatpush1.xpose.msra.mxu0 0.0
    %744 = vmatprep.subr.mxu0 0.0
    %745 = vmatpush1.xpose.msra.mxu0 0.0
    %746 = vmatprep.subr.mxu0 0.0
    %747 = vmatpush1.xpose.msra.mxu0 0.0
    %748 = vmatprep.subr.mxu0 0.0
    %749 = vmatpush1.xpose.msra.mxu0 0.0
    %750 = vmatprep.subr.mxu0 0.0
    %751 = vmatpush1.xpose.msra.mxu0 0.0
    %752 = vmatprep.subr.mxu0 0.0
    %753 = vmatpush1.xpose.msra.mxu0 0.0
    %754 = vmatprep.subr.mxu0 0.0
    %755 = vmatpush1.xpose.msra.mxu0 0.0
    %756 = vmatprep.subr.mxu0 0.0
    %757 = vmatpush1.xpose.msra.mxu0 0.0
    %758 = vmatprep.subr.mxu0 0.0
    %759 = vmatpush1.xpose.msra.mxu0 0.0
    %760 = vmatprep.subr.mxu0 0.0
    %761 = vmatpush1.xpose.msra.mxu0 0.0
    %762 = vmatprep.subr.mxu0 0.0
    %763 = vmatpush1.xpose.msra.mxu0 0.0
    %764 = vmatprep.subr.mxu0 0.0
    %765 = vmatpush1.xpose.msra.mxu0 0.0
    %766 = vmatprep.mubr.f32.mxu0 0.0
    %767 = vmatmul.mubr.f32.gmra.mrb[0].mxu0 %v697
    %v768 = vpop.f32.mrb[0].mxu0
    %v769 = vadd.f32 %v694, %v768
    %v770 = vpop.f32.mrb[0].mxu0
    %771 = vdwg.mxu0
    %773 = vrot.lane.b32.xlu0 %v769, 16
    %v774 = vpop.permute.xlu0 %773
    %v776 = vsel %vm32, %v660, %v774
    %vm777 = vcmask 188416
    %778 = vst.msk [vmem:[#allocation2] sm:$0x1] %vm777, %v776
    // Predicated region
    $region10: #{tpu_custom_call.1} parent=1 // pred_check
      _
    $region11: #{tpu_custom_call.1} parent=1 // pred_check_branch
      %780 = sbr.rel (0) target = $region13
    $region12: #{tpu_custom_call.1} parent=1 // pred_region
      %s782 = ssub.s32 16, 16
      %783 = vsyncadd [#allocation3], %s782
      %s785 = sshll.u32 [#allocation2], 4
      %s786 = int_to_ptr.vmem [resolvable:$true] %s785
      %788 = dma.vmem_to_hbm [thread:$0]  %s786, 16, %s2, [#allocation3]
    $region13: #{tpu_custom_call.1} parent=1 // pred_fallthru
      _
    // Predicated region
    $region14: #{tpu_custom_call.1} parent=1 // pred_check
      _
    $region15: #{tpu_custom_call.1} parent=1 // pred_check_branch
      %790 = sbr.rel (0) target = $region17
    $region16: #{tpu_custom_call.1} parent=1 // pred_region
      %791 = dma.done [#allocation3], 16
    $region17: #{tpu_custom_call.1} parent=1 // pred_fallthru
      _
    %792 = vsyncpa [#allocation3], 1

</llo_original>
